<compile_context>
chip_gen: v5e
topology: v5e:2x2
jax: 0.10.0
libtpu: 0.0.40
codegen_flags: <defaults>
</compile_context>

<pallas_src>
import functools

import jax
import jax.numpy as jnp
import numpy as np
from jax.experimental import pallas as pl
from jax.experimental.pallas import tpu as pltpu

EPS = 0.4
TRG_PAD_IDX = 0


def _smooth_ce_kernel(pred_ref, gold_ref, out_ref, *,
                      eps, pad_idx, n_rows, blocks_per_split):
    c = pl.program_id(0)           # split (TensorCore) index
    i = pl.program_id(1)           # block index within this split

    @pl.when(i == 0)
    def _():
        out_ref[...] = jnp.zeros_like(out_ref)

    logits = pred_ref[...].astype(jnp.float32)              # (TM, V)
    gold = gold_ref[...]                                     # (TM, 1) int32
    tm, n_class = logits.shape

    # log-softmax pieces (no (TM,V) log_prb materialized)
    m = jnp.max(logits, axis=-1, keepdims=True)              # (TM, 1)
    shifted = logits - m                                      # (TM, V)
    lse = jnp.log(jnp.sum(jnp.exp(shifted), axis=-1, keepdims=True))  # (TM, 1)

    # fused smoothed-one-hot reduce: sum(w) == 1, so
    #   loss = -sum(w * (shifted - lse)) = lse - sum(w * shifted)
    eps_off = eps / (n_class - 1)
    col = jax.lax.broadcasted_iota(jnp.int32, shifted.shape, 1)
    w = jnp.where(col == gold, 1.0 - eps, eps_off)            # (TM, V)
    wsum = jnp.sum(w * shifted, axis=-1, keepdims=True)       # (TM, 1)
    loss = lse - wsum                                          # (TM, 1)

    # mask pad-token rows and rows past the true (unpadded) end of the input
    blk = c * blocks_per_split + i                             # logical block id
    row = blk * tm + jax.lax.broadcasted_iota(jnp.int32, (tm, 1), 0)
    valid = jnp.logical_and(gold != pad_idx, row < n_rows)
    blk_sum = jnp.sum(jnp.where(valid, loss, 0.0))             # scalar (XLU reduce)

    # accumulate directly into the grid-resident output block (one vreg)
    out_ref[...] += blk_sum


def _num_tensorcores():
    """Best-effort TensorCores-per-device; 0 if unknown."""
    try:
        info = pltpu.get_tpu_info()
        for name in ("num_cores", "core_count", "num_tensorcores", "cores_per_chip"):
            v = getattr(info, name, None)
            if isinstance(v, int) and v > 0:
                return v
    except Exception:
        pass
    try:
        v = getattr(jax.devices()[0], "num_cores", None)
        if isinstance(v, int) and v > 0:
            return v
    except Exception:
        pass
    return 0


def smooth_ce_sum(pred, gold, eps=EPS, trg_pad_idx=TRG_PAD_IDX, tm=None):
    """pred: (..., V) float (f32 or bf16 -- do NOT pre-cast), gold: (...) int.
    Returns scalar sum of label-smoothed CE over non-pad tokens (reduction='sum')."""
    V = pred.shape[-1]
    pred2 = pred.reshape(-1, V)                 # keep caller dtype; kernel upcasts
    gold2 = gold.reshape(-1, 1).astype(jnp.int32)
    N = pred2.shape[0]

    itemsize = jnp.dtype(pred2.dtype).itemsize
    row_align = {4: 8, 2: 16, 1: 32}.get(itemsize, 8)   # sublane packing per dtype

    if tm is None:
        # Per-row VMEM cost (bytes), conservative so the worst case stays under
        # the 48 MiB scoped limit and v7x's 64 MiB/TC physical VMEM:
        #   2*V*itemsize : double-buffered pred input tile
        #   4*V*4        : Mosaic-materialized (TM,V) f32 temps (f32 copy/shifted/exp/w)
        #   6*512        : (TM,1) f32 reduction intermediates, (8,128)-tile padded
        #   2*512        : gold (TM,1) int32 lane-pads to (TM,128), double-buffered
        per_row = 2 * V * itemsize + 4 * V * 4 + 6 * 512 + 2 * 512
        tm = (40 * 1024 * 1024) // per_row
        # beyond ~8 MiB of pred per step there is no further HBM-roofline gain
        tm = min(tm, (8 * 1024 * 1024) // max(V * itemsize, 1))
    tm = max(row_align, (tm // row_align) * row_align)
    n_rounded = ((N + row_align - 1) // row_align) * row_align
    tm = min(tm, max(n_rounded, row_align))

    blocks_total = pl.cdiv(N, tm)
    ncores = _num_tensorcores()
    if blocks_total < 2:
        nsplit = 1
    elif blocks_total % 2 == 0:
        nsplit = 2                 # harmless on 1-TC chips, 2x on v7x's two cores
    else:
        # odd block count: the clamped duplicate tile only pays off with 2 TCs
        nsplit = 2 if (ncores == 0 or ncores >= 2) else 1
    bps = pl.cdiv(blocks_total, nsplit)

    def in_map(c, i):
        # clamp fully-out-of-range logical blocks onto the last real block;
        # their rows are masked in-kernel via the row < N check.
        return (jnp.minimum(c * bps + i, blocks_total - 1), 0)

    kernel = functools.partial(
        _smooth_ce_kernel, eps=float(eps), pad_idx=int(trg_pad_idx),
        n_rows=N, blocks_per_split=bps)

    cost = pl.CostEstimate(
        flops=int(6 * N * V),
        transcendentals=int(N * V),
        bytes_accessed=int(N * V * itemsize + N * 4 + nsplit * 8 * 128 * 4),
    )

    out = pl.pallas_call(
        kernel,
        out_shape=jax.ShapeDtypeStruct((nsplit, 8, 128), jnp.float32),
        grid_spec=pltpu.PrefetchScalarGridSpec(
            num_scalar_prefetch=0,
            grid=(nsplit, bps),
            in_specs=[
                pl.BlockSpec((tm, V), in_map),
                pl.BlockSpec((tm, 1), in_map),
            ],
            out_specs=pl.BlockSpec((1, 8, 128), lambda c, i: (c, 0, 0)),
        ),
        compiler_params=pltpu.CompilerParams(
            dimension_semantics=("parallel", "arbitrary"),
            vmem_limit_bytes=48 * 1024 * 1024,   # <= v7x 64 MiB/TC; fine on v5e/v6e
        ),
        cost_estimate=cost,
    )(pred2, gold2)
    return jnp.sum(out[:, 0, 0])


def _reference(pred, gold, eps=EPS, trg_pad_idx=TRG_PAD_IDX):
    V = pred.shape[-1]
    pred2 = pred.reshape(-1, V).astype(jnp.float32)
    gold1 = gold.reshape(-1)
    one_hot = jax.nn.one_hot(gold1, V, dtype=jnp.float32)
    smooth = one_hot * (1.0 - eps) + (1.0 - one_hot) * (eps / (V - 1))
    log_prb = jax.nn.log_softmax(pred2, axis=1)
    loss = -(smooth * log_prb).sum(axis=1)
    mask = (gold1 != trg_pad_idx).astype(jnp.float32)
    return (loss * mask).sum()


if __name__ == "__main__":
    key = jax.random.PRNGKey(0)
    k1, k2, k3, k4 = jax.random.split(key, 4)

    # primary example: batch=2, seq=8, vocab=32 (single block, single split)
    B, S, V = 2, 8, 32
    pred = jax.random.normal(k1, (B, S, V), dtype=jnp.float32)
    gold = jax.random.randint(k2, (B, S), 0, V, dtype=jnp.int32)  # may include pad(0)
    out = jax.block_until_ready(smooth_ce_sum(pred, gold))
    ref = _reference(pred, gold)
    np.testing.assert_allclose(np.asarray(out), np.asarray(ref),
                               rtol=1e-4, atol=1e-4)

    # ragged row count + multi-block grid + clamped-tail / split path
    B2, S2, V2 = 2, 9, 32
    pred_b = jax.random.normal(k3, (B2, S2, V2), dtype=jnp.float32)
    gold_b = jax.random.randint(k4, (B2, S2), 0, V2, dtype=jnp.int32)
    out_b = jax.block_until_ready(smooth_ce_sum(pred_b, gold_b, tm=8))
    ref_b = _reference(pred_b, gold_b)
    np.testing.assert_allclose(np.asarray(out_b), np.asarray(ref_b),
                               rtol=1e-4, atol=1e-4)

    # bf16 logits path: wrapper does not pre-cast; kernel upcasts in VMEM
    B3, S3, V3 = 2, 16, 64
    pred_c = jax.random.normal(k1, (B3, S3, V3), dtype=jnp.bfloat16)
    gold_c = jax.random.randint(k2, (B3, S3), 0, V3, dtype=jnp.int32)
    out_c = jax.block_until_ready(smooth_ce_sum(pred_c, gold_c))
    ref_c = _reference(pred_c, gold_c)
    np.testing.assert_allclose(np.asarray(out_c), np.asarray(ref_c),
                               rtol=2e-3, atol=2e-3)

    print("KERNEL_OK")
</pallas_src>

<mosaic_0001>
module attributes {stable_mosaic.version = 11 : i64} {
  func.func @_smooth_ce_kernel(%arg0: i32, %arg1: i32, %arg2: memref<16x32xf32, #tpu.memory_space<vmem>>, %arg3: memref<16x1xi32, #tpu.memory_space<vmem>>, %arg4: memref<1x8x128xf32, #tpu.memory_space<vmem>>) attributes {dimension_semantics = [#tpu.dimension_semantics<parallel>, #tpu.dimension_semantics<arbitrary>], iteration_bounds = array<i64: 1, 1>, scalar_prefetch = 0 : i64, scratch_operands = 0 : i64, tpu.core_type = #tpu.core_type<tc>, window_params = [{transform_indices = @transform_0, window_bounds = array<i64: 16, 32>}, {transform_indices = @transform_1, window_bounds = array<i64: 16, 1>}, {transform_indices = @transform_2, window_bounds = array<i64: 1, 8, 128>}]} {
    %c0_i32 = arith.constant 0 : i32
    %0 = arith.cmpi eq, %arg1, %c0_i32 : i32
    %1 = arith.extui %0 : i1 to i32
    %c0_i32_0 = arith.constant 0 : i32
    %2 = arith.cmpi ne, %1, %c0_i32_0 : i32
    scf.if %2 {
      %cst_18 = arith.constant 0.000000e+00 : f32
      %44 = vector.broadcast %cst_18 : f32 to vector<1x8x128xf32>
      %c0_19 = arith.constant 0 : index
      %c0_20 = arith.constant 0 : index
      %c0_21 = arith.constant 0 : index
      %45 = vector.load %arg4[%c0_19, %c0_20, %c0_21] : memref<1x8x128xf32, #tpu.memory_space<vmem>>, vector<1x8x128xf32>
      tpu.vector_store %arg4[%c0_19, %c0_20, %c0_21], %44 {strides = array<i32>} : memref<1x8x128xf32, #tpu.memory_space<vmem>>, vector<1x8x128xf32>,
    } else {
    }
    %c0 = arith.constant 0 : index
    %c0_1 = arith.constant 0 : index
    %3 = vector.load %arg2[%c0, %c0_1] : memref<16x32xf32, #tpu.memory_space<vmem>>, vector<16x32xf32>
    %c0_2 = arith.constant 0 : index
    %c0_3 = arith.constant 0 : index
    %4 = vector.load %arg3[%c0_2, %c0_3] : memref<16x1xi32, #tpu.memory_space<vmem>>, vector<16x1xi32>
    %cst = arith.constant dense<0xFF800000> : vector<16xf32>
    %5 = vector.multi_reduction <maximumf>, %3, %cst [1] : vector<16x32xf32> to vector<16xf32>
    %6 = vector.shape_cast %5 : vector<16xf32> to vector<16x1xf32>
    %7 = vector.broadcast %6 : vector<16x1xf32> to vector<16x32xf32>
    %8 = arith.subf %3, %7 : vector<16x32xf32>
    %9 = math.exp %8 : vector<16x32xf32>
    %cst_4 = arith.constant dense<0.000000e+00> : vector<16xf32>
    %10 = vector.multi_reduction <add>, %9, %cst_4 [1] : vector<16x32xf32> to vector<16xf32>
    %11 = vector.shape_cast %10 : vector<16xf32> to vector<16x1xf32>
    %12 = math.log %11 : vector<16x1xf32>
    %13 = tpu.iota {dimensions = array<i32: 1>} : vector<16x32xi32>
    %14 = vector.broadcast %4 : vector<16x1xi32> to vector<16x32xi32>
    %15 = arith.cmpi eq, %13, %14 : vector<16x32xi32>
    %cst_5 = arith.constant 6.000000e-01 : f32
    %cst_6 = arith.constant 0.0129032256 : f32
    %16 = vector.broadcast %cst_5 : f32 to vector<16x32xf32>
    %17 = vector.broadcast %cst_6 : f32 to vector<16x32xf32>
    %18 = arith.select %15, %16, %17 : vector<16x32xi1>, vector<16x32xf32>
    %19 = arith.mulf %18, %8 : vector<16x32xf32>
    %cst_7 = arith.constant dense<0.000000e+00> : vector<16xf32>
    %20 = vector.multi_reduction <add>, %19, %cst_7 [1] : vector<16x32xf32> to vector<16xf32>
    %21 = vector.shape_cast %20 : vector<16xf32> to vector<16x1xf32>
    %22 = arith.subf %12, %21 : vector<16x1xf32>
    %c1_i32 = arith.constant 1 : i32
    %23 = arith.muli %arg0, %c1_i32 : i32
    %24 = arith.addi %23, %arg1 : i32
    %c16_i32 = arith.constant 16 : i32
    %25 = arith.muli %24, %c16_i32 : i32
    %26 = tpu.iota {dimensions = array<i32: 0>} : vector<16x1xi32>
    %27 = vector.broadcast %25 : i32 to vector<16x1xi32>
    %28 = arith.addi %27, %26 : vector<16x1xi32>
    %c0_i32_8 = arith.constant 0 : i32
    %29 = vector.broadcast %c0_i32_8 : i32 to vector<16x1xi32>
    %30 = arith.cmpi ne, %4, %29 : vector<16x1xi32>
    %c16_i32_9 = arith.constant 16 : i32
    %31 = vector.broadcast %c16_i32_9 : i32 to vector<16x1xi32>
    %32 = arith.cmpi slt, %28, %31 : vector<16x1xi32>
    %33 = arith.andi %30, %32 : vector<16x1xi1>
    %cst_10 = arith.constant 0.000000e+00 : f32
    %34 = vector.broadcast %cst_10 : f32 to vector<16x1xf32>
    %35 = arith.select %33, %22, %34 : vector<16x1xi1>, vector<16x1xf32>
    %36 = vector.shape_cast %35 : vector<16x1xf32> to vector<1x16x1xf32>
    %cst_11 = arith.constant dense<0.000000e+00> : vector<1xf32>
    %37 = vector.multi_reduction <add>, %36, %cst_11 [1, 2] : vector<1x16x1xf32> to vector<1xf32>
    %38 = vector.shape_cast %37 : vector<1xf32> to vector<1x1x1xf32>
    %39 = vector.extract %38[0, 0, 0] : f32 from vector<1x1x1xf32>
    %c0_12 = arith.constant 0 : index
    %c0_13 = arith.constant 0 : index
    %c0_14 = arith.constant 0 : index
    %40 = vector.load %arg4[%c0_12, %c0_13, %c0_14] : memref<1x8x128xf32, #tpu.memory_space<vmem>>, vector<1x8x128xf32>
    %41 = vector.broadcast %39 : f32 to vector<1x8x128xf32>
    %42 = arith.addf %40, %41 : vector<1x8x128xf32>
    %c0_15 = arith.constant 0 : index
    %c0_16 = arith.constant 0 : index
    %c0_17 = arith.constant 0 : index
    %43 = vector.load %arg4[%c0_15, %c0_16, %c0_17] : memref<1x8x128xf32, #tpu.memory_space<vmem>>, vector<1x8x128xf32>
    tpu.vector_store %arg4[%c0_15, %c0_16, %c0_17], %42 {strides = array<i32>} : memref<1x8x128xf32, #tpu.memory_space<vmem>>, vector<1x8x128xf32>,
    return
  }
  func.func @transform_0(%arg0: i32, %arg1: i32) -> (i32, i32) {
    %c1_i32 = arith.constant 1 : i32
    %0 = arith.muli %arg0, %c1_i32 : i32
    %1 = arith.addi %0, %arg1 : i32
    %c0_i32 = arith.constant 0 : i32
    %2 = arith.minsi %1, %c0_i32 : i32
    %c0_i32_0 = arith.constant 0 : i32
    %c0_i32_1 = arith.constant 0 : i32
    return %2, %c0_i32_0 : i32, i32
  }
  func.func @transform_1(%arg0: i32, %arg1: i32) -> (i32, i32) {
    %c1_i32 = arith.constant 1 : i32
    %0 = arith.muli %arg0, %c1_i32 : i32
    %1 = arith.addi %0, %arg1 : i32
    %c0_i32 = arith.constant 0 : i32
    %2 = arith.minsi %1, %c0_i32 : i32
    %c0_i32_0 = arith.constant 0 : i32
    %c0_i32_1 = arith.constant 0 : i32
    return %2, %c0_i32_0 : i32, i32
  }
  func.func @transform_2(%arg0: i32, %arg1: i32) -> (i32, i32, i32) {
    %c0_i32 = arith.constant 0 : i32
    %c0_i32_0 = arith.constant 0 : i32
    %c0_i32_1 = arith.constant 0 : i32
    return %arg0, %c0_i32, %c0_i32_0 : i32, i32, i32
  }
}

</mosaic_0001>

<llo_original>
// kernel: tpu_custom_call.1
$region0: #{tpu_custom_call.1}
  #allocation0 [shape = 'u32[]', space=smem, size = 0x4, offset = 0x4, fixed_abs, tag = 'smem constant byte address 0x4 - core index']
  #allocation1 [shape = 'u32[72,128]{1,0:T(1,128)}', space=vmem, size = 0x9000, scoped, tag = 'internal scratch']
  %s0 = inlined_call_operand.vmem [shape: f32[16,32], index: 0, kind: input, shape index: {}]
  %s1 = inlined_call_operand.vmem [shape: s32[16,1], index: 1, kind: input, shape index: {}]
  %s2 = inlined_call_operand.hbm [shape: f32[1,8,128], index: 2, kind: output, shape index: {}]
  %s3 = sld [smem:[#allocation0]]
  $region22: #{tpu_custom_call.1} parent=0
    _
  %s5 = ssub.s32 1, %s3
  %s6 = scalar_select 0, %s5, %s3
  $region1: #{tpu_custom_call.1} parent=0
    #allocation2 [shape = 'u8[4096]{0}', space=vmem, size = 0x1000, scoped, tag = 'output window, operand 0, single buffered']
    #allocation3 [shape = 's32[1]{0}', space=sflag, size = 0x4, scoped, tag = 'scoped memory for tpu_custom_call.1']
    %7 = vsyncpa [#allocation3], 0
    // Predicated region
    $region2: #{tpu_custom_call.1} parent=1 // pred_check
      _
    $region3: #{tpu_custom_call.1} parent=1 // pred_check_branch
      %9 = sbr.rel (0) target = $region5
    $region4: #{tpu_custom_call.1} parent=1 // pred_region
      %s10 = sadd.s32 0, 0
      %p11 = scmp.lt.s32.totalorder %s10, 0
      %s12 = scalar_select %p11, %s10, 0
      %s13 = smul.u32 2, %s12
      %p14 = scmp.lt.s32.totalorder %s13, 1
      %s15 = scalar_select %p14, %s13, 1
      %s16 = smul.addr %s15, 8
      %s17 = scalar_lea.vmem %s0, %s16
      %s18 = sadd.s32 0, 0
      %p19 = scmp.lt.s32.totalorder %s18, 0
      %s20 = scalar_select %p19, %s18, 0
      %s21 = smul.u32 2, %s20
    $region5: #{tpu_custom_call.1} parent=1 // pred_fallthru
      _
    // Predicated region
    $region6: #{tpu_custom_call.1} parent=1 // pred_check
      _
    $region7: #{tpu_custom_call.1} parent=1 // pred_check_branch
      %23 = sbr.rel (0) target = $region9
    $region8: #{tpu_custom_call.1} parent=1 // pred_region
      %s24 = sadd.s32 0, 0
      %p25 = scmp.lt.s32.totalorder %s24, 0
      %s26 = scalar_select %p25, %s24, 0
      %s27 = smul.u32 2, %s26
      %p28 = scmp.lt.s32.totalorder %s27, 1
      %s29 = scalar_select %p28, %s27, 1
      %s30 = smul.addr %s29, 8
      %s31 = scalar_lea.vmem %s1, %s30
      %s32 = sadd.s32 0, 0
      %p33 = scmp.lt.s32.totalorder %s32, 0
      %s34 = scalar_select %p33, %s32, 0
      %s35 = smul.u32 2, %s34
    $region9: #{tpu_custom_call.1} parent=1 // pred_fallthru
      _
    %s36 = sadd.s32 0, 0
    %p37 = scmp.lt.s32.totalorder %s36, 0
    %s38 = scalar_select %p37, %s36, 0
    %s39 = smul.u32 2, %s38
    %p40 = scmp.lt.s32.totalorder %s39, 1
    %s41 = scalar_select %p40, %s39, 1
    %s42 = smul.addr %s41, 8
    %s43 = scalar_lea.vmem %s0, %s42
    %s44 = sadd.s32 0, 0
    %p45 = scmp.lt.s32.totalorder %s44, 0
    %s46 = scalar_select %p45, %s44, 0
    %s47 = smul.u32 2, %s46
    %p48 = scmp.lt.s32.totalorder %s47, 1
    %s49 = scalar_select %p48, %s47, 1
    %s50 = smul.addr %s49, 8
    %s51 = scalar_lea.vmem %s1, %s50
    %s52 = sadd.s32 0, 0
    %p53 = scmp.lt.s32.totalorder %s52, 0
    %s54 = scalar_select %p53, %s52, 0
    %s55 = smul.u32 2, %s54
    %p56 = scmp.lt.s32.totalorder %s55, 1
    %s57 = scalar_select %p56, %s55, 1
    %s58 = smul.addr %s57, 8
    %s59 = scalar_lea.vmem %s0, %s58
    %s60 = sadd.s32 0, 0
    %p61 = scmp.lt.s32.totalorder %s60, 0
    %s62 = scalar_select %p61, %s60, 0
    %s63 = smul.u32 2, %s62
    %s64 = sadd.s32 0, 0
    %p65 = scmp.lt.s32.totalorder %s64, 0
    %s66 = scalar_select %p65, %s64, 0
    %s67 = smul.u32 2, %s66
    %p68 = scmp.lt.s32.totalorder %s67, 1
    %s69 = scalar_select %p68, %s67, 1
    %s70 = smul.addr %s69, 8
    %s71 = scalar_lea.vmem %s1, %s70
    %s72 = sadd.s32 0, 0
    %p73 = scmp.lt.s32.totalorder %s72, 0
    %s74 = scalar_select %p73, %s72, 0
    %s75 = smul.u32 2, %s74
    %p76 = scmp.eq.s32.totalorder 0, 0
    // Predicated region
    $region10: #{tpu_custom_call.1} parent=1 // pred_check
      %p77 = pneg %p76
    $region11: #{tpu_custom_call.1} parent=1 // pred_check_branch
      %79 = sbr.rel (%p77) target = $region13
    $region12: #{tpu_custom_call.1} parent=1 // pred_region
      %80 = vst [vmem:[#allocation2] sm:$0xff] 0.0
    $region13: #{tpu_custom_call.1} parent=1 // pred_fallthru
      _
    %v81 = vld [vmem:[%s59] sm:$0xff]
    %v82 = vld [vmem:[%s59 + $0x8] sm:$0xff]
    %v83 = vld [vmem:[%s71] sm:$0xff]
    %v84 = vld [vmem:[%s71 + $0x8] sm:$0xff]
    %vm85 = vcmask 261120
    %v86 = vsel %vm85, %v81, -inf
    %87 = vmax.xlane.f32.xlu0 %v86
    %v88 = vpop.xlane.xlu0 %87
    %v89 = vsel %vm85, %v82, -inf
    %90 = vmax.xlane.f32.xlu0 %v89
    %v91 = vpop.xlane.xlu0 %90
    %v92 = vsub.f32 %v81, %v88
    %v93 = vsub.f32 %v82, %v91
    %v94 = vmul.f32 %v92, 1.442695
    %v95 = vpow.pop %v94
    %v96 = vmul.f32 %v93, 1.442695
    %v97 = vpow.pop %v96
    %v98 = vsel %vm85, %v95, 0.0
    %99 = vadd.xlane.f32.xlu0 %v98
    %v100 = vpop.xlane.xlu0 %99
    %v101 = vsel %vm85, %v97, 0.0
    %102 = vadd.xlane.f32.xlu0 %v101
    %v103 = vpop.xlane.xlu0 %102
    %v104 = vlog2.pop %v100
    %v105 = vmul.f32 %v104, 0.6931472
    %v106 = vlog2.pop %v103
    %v107 = vmul.f32 %v106, 0.6931472
    %v108 = vlaneseq
    %v109 = vand.u32 %v108, 127
    %110 = vset.pattern.permute.xlu0 0
    %111 = vperm.xlu0 %110, %v83
    %v112 = vpop.permute.xlu0 %111
    %113 = vset.pattern.permute.xlu0 0
    %114 = vperm.xlu0 %113, %v84
    %v115 = vpop.permute.xlu0 %114
    %vm116 = vcmp.eq.s32.totalorder %v109, %v112
    %vm117 = vcmp.eq.s32.totalorder %v109, %v115
    %v118 = vsel %vm116, 0.6, 0.012903226
    %v119 = vsel %vm117, 0.6, 0.012903226
    %v120 = vmul.f32 %v118, %v92
    %v121 = vmul.f32 %v119, %v93
    %v122 = vsel %vm85, %v120, 0.0
    %123 = vadd.xlane.f32.xlu0 %v122
    %v124 = vpop.xlane.xlu0 %123
    %v125 = vsel %vm85, %v121, 0.0
    %126 = vadd.xlane.f32.xlu0 %v125
    %v127 = vpop.xlane.xlu0 %126
    %v128 = vsub.f32 %v105, %v124
    %v129 = vsub.f32 %v107, %v127
    %s130 = sadd.s32 0, 0
    %s131 = smul.u32 %s130, 16
    %v132 = vlaneseq
    %v133 = vshrl.u32 %v132, 7
    %v134 = vadd.s32 %v133, 8
    %v135 = vstv %s131
    %v136 = vadd.s32 %v135, %v133
    %v137 = vadd.s32 %v135, %v134
    %vm138 = vcmp.ne.s32.totalorder %v83, 0
    %vm139 = vcmp.ne.s32.totalorder %v84, 0
    %vm140 = vcmp.lt.s32.totalorder %v136, 16
    %vm141 = vcmp.lt.s32.totalorder %v137, 16
    %vm142 = vmand %vm138, %vm140
    %vm143 = vmand %vm139, %vm141
    %v144 = vsel %vm142, %v128, 0.0
    %v145 = vsel %vm143, %v129, 0.0
    %vm146 = vcmask 7168
    %v147 = vsel %vm146, %v144, 0.0
    %v148 = vsel %vm146, %v145, 0.0
    %v149 = vadd.f32 %v147, %v148
    %150 = vadd.xlane.f32.xlu0 %v149
    %v151 = vpop.xlane.xlu0 %150
    %v152 = vrot.slane %v151, 4
    %v153 = vadd.f32 %v151, %v152
    %v154 = vrot.slane %v153, 2
    %v155 = vadd.f32 %v153, %v154
    %v156 = vrot.slane %v155, 1
    %v157 = vadd.f32 %v155, %v156
    %s158 = vtos %v157
    %v159 = vld [vmem:[#allocation2] sm:$0xff]
    %v160 = vstv %s158
    %v161 = vadd.f32 %v159, %v160
    %162 = vst [vmem:[#allocation2] sm:$0xff] %v161
    // Predicated region
    $region14: #{tpu_custom_call.1} parent=1 // pred_check
      _
    $region15: #{tpu_custom_call.1} parent=1 // pred_check_branch
      %164 = sbr.rel (0) target = $region17
    $region16: #{tpu_custom_call.1} parent=1 // pred_region
      %166 = vsyncadd [#allocation3], 0
      %s168 = sshll.u32 [#allocation2], 4
      %s169 = int_to_ptr.vmem [resolvable:$true] %s168
      %s170 = sshll.u32 %s2, 4
      %s171 = int_to_ptr.hbm [resolvable:$true] %s170
      %173 = dma.vmem_to_hbm [thread:$0]  %s169, 128, %s171, [#allocation3]
    $region17: #{tpu_custom_call.1} parent=1 // pred_fallthru
      _
    // Predicated region
    $region18: #{tpu_custom_call.1} parent=1 // pred_check
      _
    $region19: #{tpu_custom_call.1} parent=1 // pred_check_branch
      %175 = sbr.rel (0) target = $region21
    $region20: #{tpu_custom_call.1} parent=1 // pred_region
      %177 = dma.done [#allocation3], 128
    $region21: #{tpu_custom_call.1} parent=1 // pred_fallthru
      _
    %178 = vsyncpa [#allocation3], 1

</llo_original>
